<compile_context>
chip_gen: v6e
topology: v6e:2x2x1
jax: 0.10.0
libtpu: 0.0.40
codegen_flags: <defaults>
</compile_context>

<pallas_src>
import functools

import jax
import jax.numpy as jnp
from jax.experimental import pallas as pl
from jax.experimental.pallas import tpu as pltpu


# ----------------------------------------------------------------------------
# Pallas kernel: conv1 -> relu -> (dropout=id) -> conv2 -> relu -> (dropout=id)
#                + residual (optional 1x1 conv) -> relu
# ----------------------------------------------------------------------------
def _residual_block_kernel(x_ref, w1_ref, b1_ref, w2_ref, b2_ref, *rest,
                           K, dil, P, Lt, use_fit, carry_halo, compute_dtype):
    # x_ref : (1, C_in, Lt)             current (batch, L-tile) slab (bf16)
    # w1_ref: (K, C_out, C_in)   bf16   per-tap conv1 weight slabs
    # w2_ref: (K, C_out, C_out)  bf16   per-tap conv2 weight slabs
    # b*_ref: (C_out, 1)         f32
    # rest  : [ws_ref (C_out,C_in), bs_ref (C_out,1)]?  o_ref,
    #         [x_halo (C_in,P), h1_halo (C_out,P)]?   (VMEM scratch carries)
    idx = 0
    if use_fit:
        ws_ref, bs_ref = rest[0], rest[1]
        idx = 2
    o_ref = rest[idx]
    idx += 1
    if P > 0:
        xh_ref, hh_ref = rest[idx], rest[idx + 1]

    j = pl.program_id(1)

    if P > 0:
        # First L tile of each batch row: halo == causal zero padding.
        @pl.when(j == 0)
        def _():
            xh_ref[...] = jnp.zeros_like(xh_ref)
            hh_ref[...] = jnp.zeros_like(hh_ref)

    xb = x_ref[0]                                        # (C_in, Lt), bf16

    def causal_conv(w_ref, b_ref, full):
        # K accumulating MXU dots on shifted views; f32 accumulation.
        acc = jnp.dot(w_ref[0], full[:, 0:Lt],
                      preferred_element_type=jnp.float32)
        for t in range(1, K):
            acc = acc + jnp.dot(w_ref[t], full[:, t * dil: t * dil + Lt],
                                preferred_element_type=jnp.float32)
        return acc + b_ref[...]

    # ---- conv1 -> relu1 -> (dropout1 = identity at inference) ---------------
    x_full = jnp.concatenate([xh_ref[...], xb], axis=-1) if P > 0 else xb
    h1 = jnp.maximum(causal_conv(w1_ref, b1_ref, x_full), 0.0)
    h1c = h1.astype(compute_dtype)

    # ---- conv2 -> relu2 -> (dropout2 = identity at inference) ---------------
    h1_full = jnp.concatenate([hh_ref[...], h1c], axis=-1) if P > 0 else h1c
    h2 = jnp.maximum(causal_conv(w2_ref, b2_ref, h1_full), 0.0)

    # ---- residual branch -----------------------------------------------------
    if use_fit:
        res = jnp.dot(ws_ref[...], xb,
                      preferred_element_type=jnp.float32) + bs_ref[...]
    else:
        res = xb.astype(jnp.float32)                     # identity residual

    o_ref[0] = jnp.maximum(h2 + res, 0.0).astype(o_ref.dtype)

    # ---- carry the left halo (last P cols) to the next L tile of this row ----
    if P > 0 and carry_halo:
        @pl.when(j + 1 < pl.num_programs(1))             # skip on the last tile
        def _():
            xh_ref[...] = xb[:, Lt - P:]
            hh_ref[...] = h1c[:, Lt - P:]


# ----------------------------------------------------------------------------
# VMEM budgeting / L-tile selection (generation-aware)
# ----------------------------------------------------------------------------
def _vmem_budget_bytes():
    """Per-generation VMEM limit, leaving headroom below physical VMEM."""
    try:
        kind = jax.devices()[0].device_kind.lower()
    except Exception:
        kind = ""
    if "v7" in kind:
        return 48 * 1024 * 1024       # 64 MiB physical per v7x TensorCore
    if ("v5" in kind) or ("v6" in kind):
        return 100 * 1024 * 1024      # 128 MiB physical on v5e / v6e
    return 48 * 1024 * 1024           # unknown backend: conservative


def _step_vmem_bytes(C_in, C_out, K, P, Lt, act_bytes, out_bytes):
    """Rough per-grid-step VMEM footprint (double-buffered I/O + temps)."""
    io = 2 * C_in * Lt * act_bytes + 2 * C_out * Lt * out_bytes
    weights = 2 * (K * C_out * (C_in + C_out) + C_out * (C_in + 2)) * act_bytes
    inter = (C_in * (Lt + P) * act_bytes           # x_full
             + C_out * (Lt + P) * act_bytes        # h1c / h1_full
             + 3 * C_out * Lt * 4)                 # h1, h2, res in f32
    halo = (C_in + C_out) * P * act_bytes
    return io + weights + inter + halo


def _pick_l_tile(L, P, C_in, C_out, K, act_bytes, out_bytes,
                 budget=None, max_tile=8192):
    """Largest multiple-of-128 divisor of L (>= P) fitting the VMEM budget."""
    if budget is None:
        budget = _vmem_budget_bytes()
    if L < 128 or L % 128 != 0:
        return L                                   # small / irregular L: one tile
    best = None
    cand = 128
    while cand <= min(L, max_tile):
        if (L % cand == 0 and cand >= P and
                _step_vmem_bytes(C_in, C_out, K, P, cand,
                                 act_bytes, out_bytes) <= budget // 2):
            best = cand
        cand += 128
    return best if best is not None else L


# ----------------------------------------------------------------------------
# Wrapper: weight-norm folding done by caller, per-tap weight layout,
# L tiling, BlockSpecs, pallas_call.
# ----------------------------------------------------------------------------
def residual_block(x, params, *, kernel_size, stride, dilation, left_pad,
                   compute_dtype=jnp.bfloat16, out_dtype=None, l_tile=None):
    # TODO(synk): stride != 1 not implemented (standard TCN uses stride=1).
    assert stride == 1, "only stride=1 supported"
    assert left_pad == (kernel_size - 1) * dilation, "causal TCN padding expected"

    B, C_in, L = x.shape
    K = kernel_size
    C_out = params["w1"].shape[0]
    use_fit = "ws" in params
    if not use_fit:
        assert C_in == C_out, "identity residual requires ch_in == ch_out"
    P = left_pad
    out_dtype = x.dtype if out_dtype is None else out_dtype

    act_bytes = jnp.dtype(compute_dtype).itemsize
    out_bytes = jnp.dtype(out_dtype).itemsize
    vmem_budget = _vmem_budget_bytes()

    Lt = l_tile if l_tile is not None else _pick_l_tile(
        L, P, C_in, C_out, K, act_bytes, out_bytes, budget=vmem_budget)
    assert L % Lt == 0 and (Lt == L or (Lt % 128 == 0 and Lt >= P)), \
        "invalid L tile"
    nLt = L // Lt
    assert _step_vmem_bytes(C_in, C_out, K, P, Lt, act_bytes, out_bytes) \
        <= vmem_budget, \
        "L tile exceeds the per-generation VMEM budget; pass a smaller l_tile"

    # Ship activations in the compute dtype (bf16): halves HBM input bytes.
    # Callers that already hold bf16 activations pay no extra cast here.
    x_in = x.astype(compute_dtype)

    # Per-tap weight layout (K, C_out, C_in): w_taps[t] == w[:, :, t].
    w1t = jnp.transpose(params["w1"], (2, 0, 1)).astype(compute_dtype)
    w2t = jnp.transpose(params["w2"], (2, 0, 1)).astype(compute_dtype)
    b1 = params["b1"].reshape(C_out, 1).astype(jnp.float32)
    b2 = params["b2"].reshape(C_out, 1).astype(jnp.float32)

    def rep(a):  # grid-invariant (replicated) parameter
        n = a.ndim
        return pl.BlockSpec(a.shape, lambda b, j: (0,) * n)

    in_specs = [pl.BlockSpec((1, C_in, Lt), lambda b, j: (b, 0, j)),
                rep(w1t), rep(b1), rep(w2t), rep(b2)]
    args = [x_in, w1t, b1, w2t, b2]
    if use_fit:
        ws = params["ws"].reshape(C_out, C_in).astype(compute_dtype)
        bs = params["bs"].reshape(C_out, 1).astype(jnp.float32)
        in_specs += [rep(ws), rep(bs)]
        args += [ws, bs]
    # (when use_fit is False, ws/bs are not shipped at all)

    scratch_shapes = []
    if P > 0:
        scratch_shapes = [pltpu.VMEM((C_in, P), compute_dtype),   # x halo
                          pltpu.VMEM((C_out, P), compute_dtype)]  # h1 halo

    kernel = functools.partial(
        _residual_block_kernel, K=K, dil=dilation, P=P, Lt=Lt,
        use_fit=use_fit, carry_halo=(nLt > 1), compute_dtype=compute_dtype)

    flops = 2 * B * L * C_out * (K * C_in + K * C_out + (C_in if use_fit else 0))
    bytes_accessed = int(sum(int(a.size) * a.dtype.itemsize for a in args)
                         + B * C_out * L * jnp.dtype(out_dtype).itemsize)

    grid_spec = pltpu.PrefetchScalarGridSpec(
        num_scalar_prefetch=0,
        grid=(B, nLt),
        in_specs=in_specs,
        out_specs=pl.BlockSpec((1, C_out, Lt), lambda b, j: (b, 0, j)),
        scratch_shapes=scratch_shapes,
    )

    return pl.pallas_call(
        kernel,
        out_shape=jax.ShapeDtypeStruct((B, C_out, L), out_dtype),
        grid_spec=grid_spec,
        compiler_params=pltpu.CompilerParams(
            dimension_semantics=("parallel", "arbitrary"),
            vmem_limit_bytes=vmem_budget),
        cost_estimate=pl.CostEstimate(
            flops=flops, transcendentals=0, bytes_accessed=bytes_accessed),
    )(*args)


# ----------------------------------------------------------------------------
# Deterministic parameter construction (weight_norm folded: w = g * v / ||v||)
# ----------------------------------------------------------------------------
def _fold_weight_norm(v, g):
    norm = jnp.sqrt(jnp.sum(v * v, axis=(1, 2), keepdims=True))
    return v * (g.reshape(-1, 1, 1) / norm)


def init_params(key, ch_in, ch_out, kernel_size):
    ks = jax.random.split(key, 8)
    v1 = 0.01 * jax.random.normal(ks[0], (ch_out, ch_in, kernel_size), jnp.float32)
    g1 = 1.0 + 0.1 * jax.random.normal(ks[1], (ch_out,), jnp.float32)
    v2 = 0.01 * jax.random.normal(ks[2], (ch_out, ch_out, kernel_size), jnp.float32)
    g2 = 1.0 + 0.1 * jax.random.normal(ks[3], (ch_out,), jnp.float32)
    params = {
        "w1": _fold_weight_norm(v1, g1),
        "b1": 0.01 * jax.random.normal(ks[4], (ch_out,), jnp.float32),
        "w2": _fold_weight_norm(v2, g2),
        "b2": 0.01 * jax.random.normal(ks[5], (ch_out,), jnp.float32),
    }
    if ch_in != ch_out:  # fit_shape 1x1 conv
        params["ws"] = 0.01 * jax.random.normal(ks[6], (ch_out, ch_in, 1), jnp.float32)
        params["bs"] = 0.01 * jax.random.normal(ks[7], (ch_out,), jnp.float32)
    return params


# ----------------------------------------------------------------------------
# Plain-JAX reference (full f32, for correctness check)
# ----------------------------------------------------------------------------
def reference(x, params, *, kernel_size, stride, dilation, left_pad):
    def conv1d(inp, w, b, pad, dil):
        y = jax.lax.conv_general_dilated(
            inp, w, window_strides=(stride,), padding=[(pad, 0)],
            rhs_dilation=(dil,), dimension_numbers=("NCH", "OIH", "NCH"))
        return y + b[None, :, None]

    h = jax.nn.relu(conv1d(x, params["w1"], params["b1"], left_pad, dilation))
    h = jax.nn.relu(conv1d(h, params["w2"], params["b2"], left_pad, dilation))
    if "ws" in params:
        res = conv1d(x, params["ws"], params["bs"], 0, 1)
    else:
        res = x
    return jax.nn.relu(h + res)


if __name__ == "__main__":
    root = jax.random.PRNGKey(0)

    configs = [
        # (B, C_in, C_out, L,   K, dilation, l_tile)
        (2, 4, 8, 16, 3, 2, None),    # fit_shape 1x1 residual, single L tile
        (2, 8, 8, 16, 3, 2, None),    # identity residual (ch_in == ch_out)
        (2, 8, 16, 256, 3, 4, 128),   # L-tiled path exercising the halo carry
    ]
    for i, (B, C_in, C_out, L, K, dil, lt) in enumerate(configs):
        kx, kp = jax.random.split(jax.random.fold_in(root, i))
        x = jax.random.normal(kx, (B, C_in, L), jnp.float32)
        params = init_params(kp, C_in, C_out, K)
        left_pad = (K - 1) * dil

        out = residual_block(x, params, kernel_size=K, stride=1,
                             dilation=dil, left_pad=left_pad, l_tile=lt)
        out = jax.block_until_ready(out)

        ref = reference(x, params, kernel_size=K, stride=1,
                        dilation=dil, left_pad=left_pad)
        assert out.shape == (B, C_out, L)
        # bf16 matmul operands / bf16-rounded activations with f32 accumulation:
        # compare with a tolerance scaled by the output magnitude (a genuine
        # bug — wrong tap offset / halo — produces O(scale) errors).
        err = float(jnp.max(jnp.abs(out.astype(jnp.float32) - ref)))
        scale = float(jnp.max(jnp.abs(ref)))
        tol = 2e-2 * (1.0 + scale)
        if err > tol:
            raise AssertionError(
                f"config {i}: mismatch vs reference "
                f"(max abs err {err}, tol {tol})")
    print("KERNEL_OK")
</pallas_src>

<mosaic_0001>
module attributes {stable_mosaic.version = 11 : i64} {
  func.func @_residual_block_kernel(%arg0: i32, %arg1: i32, %arg2: memref<1x4x16xbf16, #tpu.memory_space<vmem>>, %arg3: memref<3x8x4xbf16, #tpu.memory_space<vmem>>, %arg4: memref<8x1xf32, #tpu.memory_space<vmem>>, %arg5: memref<3x8x8xbf16, #tpu.memory_space<vmem>>, %arg6: memref<8x1xf32, #tpu.memory_space<vmem>>, %arg7: memref<8x4xbf16, #tpu.memory_space<vmem>>, %arg8: memref<8x1xf32, #tpu.memory_space<vmem>>, %arg9: memref<1x8x16xf32, #tpu.memory_space<vmem>>, %arg10: memref<4x4xbf16, #tpu.memory_space<vmem>>, %arg11: memref<8x4xbf16, #tpu.memory_space<vmem>>) attributes {dimension_semantics = [#tpu.dimension_semantics<parallel>, #tpu.dimension_semantics<arbitrary>], iteration_bounds = array<i64: 2, 1>, scalar_prefetch = 0 : i64, scratch_operands = 2 : i64, tpu.core_type = #tpu.core_type<tc>, window_params = [{transform_indices = @transform_0, window_bounds = array<i64: 1, 4, 16>}, {pipeline_mode = #tpu.pipeline_mode<synchronous>, transform_indices = @transform_1, window_bounds = array<i64: 3, 8, 4>}, {pipeline_mode = #tpu.pipeline_mode<synchronous>, transform_indices = @transform_2, window_bounds = array<i64: 8, 1>}, {pipeline_mode = #tpu.pipeline_mode<synchronous>, transform_indices = @transform_3, window_bounds = array<i64: 3, 8, 8>}, {pipeline_mode = #tpu.pipeline_mode<synchronous>, transform_indices = @transform_4, window_bounds = array<i64: 8, 1>}, {pipeline_mode = #tpu.pipeline_mode<synchronous>, transform_indices = @transform_5, window_bounds = array<i64: 8, 4>}, {pipeline_mode = #tpu.pipeline_mode<synchronous>, transform_indices = @transform_6, window_bounds = array<i64: 8, 1>}, {transform_indices = @transform_7, window_bounds = array<i64: 1, 8, 16>}]} {
    %c0_i32 = arith.constant 0 : i32
    %0 = arith.cmpi eq, %arg1, %c0_i32 : i32
    %1 = arith.extui %0 : i1 to i32
    %c0_i32_0 = arith.constant 0 : i32
    %2 = arith.cmpi ne, %1, %c0_i32_0 : i32
    scf.if %2 {
      %cst_43 = arith.constant 0.000000e+00 : bf16
      %59 = vector.broadcast %cst_43 : bf16 to vector<4x4xbf16>
      %c0_44 = arith.constant 0 : index
      %c0_45 = arith.constant 0 : index
      %60 = vector.load %arg10[%c0_44, %c0_45] : memref<4x4xbf16, #tpu.memory_space<vmem>>, vector<4x4xbf16>
      tpu.vector_store %arg10[%c0_44, %c0_45], %59 {strides = array<i32>} : memref<4x4xbf16, #tpu.memory_space<vmem>>, vector<4x4xbf16>,
      %cst_46 = arith.constant 0.000000e+00 : bf16
      %61 = vector.broadcast %cst_46 : bf16 to vector<8x4xbf16>
      %c0_47 = arith.constant 0 : index
      %c0_48 = arith.constant 0 : index
      %62 = vector.load %arg11[%c0_47, %c0_48] : memref<8x4xbf16, #tpu.memory_space<vmem>>, vector<8x4xbf16>
      tpu.vector_store %arg11[%c0_47, %c0_48], %61 {strides = array<i32>} : memref<8x4xbf16, #tpu.memory_space<vmem>>, vector<8x4xbf16>,
    } else {
    }
    %c0 = arith.constant 0 : index
    %c0_1 = arith.constant 0 : index
    %c0_2 = arith.constant 0 : index
    %3 = vector.load %arg2[%c0, %c0_1, %c0_2] : memref<1x4x16xbf16, #tpu.memory_space<vmem>>, vector<1x4x16xbf16>
    %4 = vector.shape_cast %3 : vector<1x4x16xbf16> to vector<4x16xbf16>
    %c0_3 = arith.constant 0 : index
    %c0_4 = arith.constant 0 : index
    %5 = vector.load %arg10[%c0_3, %c0_4] : memref<4x4xbf16, #tpu.memory_space<vmem>>, vector<4x4xbf16>
    %6 = tpu.concatenate %5, %4 in 1 : vector<4x4xbf16>, vector<4x16xbf16> -> vector<4x20xbf16>
    %c0_5 = arith.constant 0 : index
    %c0_6 = arith.constant 0 : index
    %c0_7 = arith.constant 0 : index
    %7 = vector.load %arg3[%c0_5, %c0_6, %c0_7] : memref<3x8x4xbf16, #tpu.memory_space<vmem>>, vector<1x8x4xbf16>
    %8 = vector.shape_cast %7 : vector<1x8x4xbf16> to vector<8x4xbf16>
    %9 = vector.extract_strided_slice %6 {offsets = [0, 0], sizes = [4, 16], strides = [1, 1]} : vector<4x20xbf16> to vector<4x16xbf16>
    %cst = arith.constant dense<0.000000e+00> : vector<8x16xf32>
    %10 = tpu.matmul %8, %9, %cst {dimension_numbers = #tpu.dot_dimension_numbers<[1], [0], [0], [1], [0, 0, 1, 1], [], []>} : vector<8x4xbf16>, vector<4x16xbf16>, vector<8x16xf32> -> vector<8x16xf32>
    %c1 = arith.constant 1 : index
    %c0_8 = arith.constant 0 : index
    %c0_9 = arith.constant 0 : index
    %11 = vector.load %arg3[%c1, %c0_8, %c0_9] : memref<3x8x4xbf16, #tpu.memory_space<vmem>>, vector<1x8x4xbf16>
    %12 = vector.shape_cast %11 : vector<1x8x4xbf16> to vector<8x4xbf16>
    %13 = vector.extract_strided_slice %6 {offsets = [0, 2], sizes = [4, 16], strides = [1, 1]} : vector<4x20xbf16> to vector<4x16xbf16>
    %cst_10 = arith.constant dense<0.000000e+00> : vector<8x16xf32>
    %14 = tpu.matmul %12, %13, %cst_10 {dimension_numbers = #tpu.dot_dimension_numbers<[1], [0], [0], [1], [0, 0, 1, 1], [], []>} : vector<8x4xbf16>, vector<4x16xbf16>, vector<8x16xf32> -> vector<8x16xf32>
    %15 = arith.addf %10, %14 : vector<8x16xf32>
    %c2 = arith.constant 2 : index
    %c0_11 = arith.constant 0 : index
    %c0_12 = arith.constant 0 : index
    %16 = vector.load %arg3[%c2, %c0_11, %c0_12] : memref<3x8x4xbf16, #tpu.memory_space<vmem>>, vector<1x8x4xbf16>
    %17 = vector.shape_cast %16 : vector<1x8x4xbf16> to vector<8x4xbf16>
    %18 = vector.extract_strided_slice %6 {offsets = [0, 4], sizes = [4, 16], strides = [1, 1]} : vector<4x20xbf16> to vector<4x16xbf16>
    %cst_13 = arith.constant dense<0.000000e+00> : vector<8x16xf32>
    %19 = tpu.matmul %17, %18, %cst_13 {dimension_numbers = #tpu.dot_dimension_numbers<[1], [0], [0], [1], [0, 0, 1, 1], [], []>} : vector<8x4xbf16>, vector<4x16xbf16>, vector<8x16xf32> -> vector<8x16xf32>
    %20 = arith.addf %15, %19 : vector<8x16xf32>
    %c0_14 = arith.constant 0 : index
    %c0_15 = arith.constant 0 : index
    %21 = vector.load %arg4[%c0_14, %c0_15] : memref<8x1xf32, #tpu.memory_space<vmem>>, vector<8x1xf32>
    %22 = vector.broadcast %21 : vector<8x1xf32> to vector<8x16xf32>
    %23 = arith.addf %20, %22 : vector<8x16xf32>
    %cst_16 = arith.constant 0.000000e+00 : f32
    %24 = vector.broadcast %cst_16 : f32 to vector<8x16xf32>
    %25 = arith.maximumf %23, %24 : vector<8x16xf32>
    %26 = arith.truncf %25 : vector<8x16xf32> to vector<8x16xbf16>
    %c0_17 = arith.constant 0 : index
    %c0_18 = arith.constant 0 : index
    %27 = vector.load %arg11[%c0_17, %c0_18] : memref<8x4xbf16, #tpu.memory_space<vmem>>, vector<8x4xbf16>
    %28 = tpu.concatenate %27, %26 in 1 : vector<8x4xbf16>, vector<8x16xbf16> -> vector<8x20xbf16>
    %c0_19 = arith.constant 0 : index
    %c0_20 = arith.constant 0 : index
    %c0_21 = arith.constant 0 : index
    %29 = vector.load %arg5[%c0_19, %c0_20, %c0_21] : memref<3x8x8xbf16, #tpu.memory_space<vmem>>, vector<1x8x8xbf16>
    %30 = vector.shape_cast %29 : vector<1x8x8xbf16> to vector<8x8xbf16>
    %31 = vector.extract_strided_slice %28 {offsets = [0, 0], sizes = [8, 16], strides = [1, 1]} : vector<8x20xbf16> to vector<8x16xbf16>
    %cst_22 = arith.constant dense<0.000000e+00> : vector<8x16xf32>
    %32 = tpu.matmul %30, %31, %cst_22 {dimension_numbers = #tpu.dot_dimension_numbers<[1], [0], [0], [1], [0, 0, 1, 1], [], []>} : vector<8x8xbf16>, vector<8x16xbf16>, vector<8x16xf32> -> vector<8x16xf32>
    %c1_23 = arith.constant 1 : index
    %c0_24 = arith.constant 0 : index
    %c0_25 = arith.constant 0 : index
    %33 = vector.load %arg5[%c1_23, %c0_24, %c0_25] : memref<3x8x8xbf16, #tpu.memory_space<vmem>>, vector<1x8x8xbf16>
    %34 = vector.shape_cast %33 : vector<1x8x8xbf16> to vector<8x8xbf16>
    %35 = vector.extract_strided_slice %28 {offsets = [0, 2], sizes = [8, 16], strides = [1, 1]} : vector<8x20xbf16> to vector<8x16xbf16>
    %cst_26 = arith.constant dense<0.000000e+00> : vector<8x16xf32>
    %36 = tpu.matmul %34, %35, %cst_26 {dimension_numbers = #tpu.dot_dimension_numbers<[1], [0], [0], [1], [0, 0, 1, 1], [], []>} : vector<8x8xbf16>, vector<8x16xbf16>, vector<8x16xf32> -> vector<8x16xf32>
    %37 = arith.addf %32, %36 : vector<8x16xf32>
    %c2_27 = arith.constant 2 : index
    %c0_28 = arith.constant 0 : index
    %c0_29 = arith.constant 0 : index
    %38 = vector.load %arg5[%c2_27, %c0_28, %c0_29] : memref<3x8x8xbf16, #tpu.memory_space<vmem>>, vector<1x8x8xbf16>
    %39 = vector.shape_cast %38 : vector<1x8x8xbf16> to vector<8x8xbf16>
    %40 = vector.extract_strided_slice %28 {offsets = [0, 4], sizes = [8, 16], strides = [1, 1]} : vector<8x20xbf16> to vector<8x16xbf16>
    %cst_30 = arith.constant dense<0.000000e+00> : vector<8x16xf32>
    %41 = tpu.matmul %39, %40, %cst_30 {dimension_numbers = #tpu.dot_dimension_numbers<[1], [0], [0], [1], [0, 0, 1, 1], [], []>} : vector<8x8xbf16>, vector<8x16xbf16>, vector<8x16xf32> -> vector<8x16xf32>
    %42 = arith.addf %37, %41 : vector<8x16xf32>
    %c0_31 = arith.constant 0 : index
    %c0_32 = arith.constant 0 : index
    %43 = vector.load %arg6[%c0_31, %c0_32] : memref<8x1xf32, #tpu.memory_space<vmem>>, vector<8x1xf32>
    %44 = vector.broadcast %43 : vector<8x1xf32> to vector<8x16xf32>
    %45 = arith.addf %42, %44 : vector<8x16xf32>
    %cst_33 = arith.constant 0.000000e+00 : f32
    %46 = vector.broadcast %cst_33 : f32 to vector<8x16xf32>
    %47 = arith.maximumf %45, %46 : vector<8x16xf32>
    %c0_34 = arith.constant 0 : index
    %c0_35 = arith.constant 0 : index
    %48 = vector.load %arg7[%c0_34, %c0_35] : memref<8x4xbf16, #tpu.memory_space<vmem>>, vector<8x4xbf16>
    %cst_36 = arith.constant dense<0.000000e+00> : vector<8x16xf32>
    %49 = tpu.matmul %48, %4, %cst_36 {dimension_numbers = #tpu.dot_dimension_numbers<[1], [0], [0], [1], [0, 0, 1, 1], [], []>} : vector<8x4xbf16>, vector<4x16xbf16>, vector<8x16xf32> -> vector<8x16xf32>
    %c0_37 = arith.constant 0 : index
    %c0_38 = arith.constant 0 : index
    %50 = vector.load %arg8[%c0_37, %c0_38] : memref<8x1xf32, #tpu.memory_space<vmem>>, vector<8x1xf32>
    %51 = vector.broadcast %50 : vector<8x1xf32> to vector<8x16xf32>
    %52 = arith.addf %49, %51 : vector<8x16xf32>
    %53 = arith.addf %47, %52 : vector<8x16xf32>
    %cst_39 = arith.constant 0.000000e+00 : f32
    %54 = vector.broadcast %cst_39 : f32 to vector<8x16xf32>
    %55 = arith.maximumf %53, %54 : vector<8x16xf32>
    %c0_40 = arith.constant 0 : index
    %c0_41 = arith.constant 0 : index
    %c0_42 = arith.constant 0 : index
    %56 = vector.load %arg9[%c0_40, %c0_41, %c0_42] : memref<1x8x16xf32, #tpu.memory_space<vmem>>, vector<1x8x16xf32>
    %57 = vector.shape_cast %56 : vector<1x8x16xf32> to vector<8x16xf32>
    %58 = vector.shape_cast %55 : vector<8x16xf32> to vector<1x8x16xf32>
    tpu.vector_store %arg9[%c0_40, %c0_41, %c0_42], %58 {strides = array<i32>} : memref<1x8x16xf32, #tpu.memory_space<vmem>>, vector<1x8x16xf32>,
    return
  }
  func.func @transform_0(%arg0: i32, %arg1: i32) -> (i32, i32, i32) {
    %c0_i32 = arith.constant 0 : i32
    %c0_i32_0 = arith.constant 0 : i32
    return %arg0, %c0_i32, %arg1 : i32, i32, i32
  }
  func.func @transform_1(%arg0: i32, %arg1: i32) -> (i32, i32, i32) {
    %c0_i32 = arith.constant 0 : i32
    %c0_i32_0 = arith.constant 0 : i32
    %c0_i32_1 = arith.constant 0 : i32
    %c0_i32_2 = arith.constant 0 : i32
    return %c0_i32, %c0_i32_0, %c0_i32_1 : i32, i32, i32
  }
  func.func @transform_2(%arg0: i32, %arg1: i32) -> (i32, i32) {
    %c0_i32 = arith.constant 0 : i32
    %c0_i32_0 = arith.constant 0 : i32
    %c0_i32_1 = arith.constant 0 : i32
    return %c0_i32, %c0_i32_0 : i32, i32
  }
  func.func @transform_3(%arg0: i32, %arg1: i32) -> (i32, i32, i32) {
    %c0_i32 = arith.constant 0 : i32
    %c0_i32_0 = arith.constant 0 : i32
    %c0_i32_1 = arith.constant 0 : i32
    %c0_i32_2 = arith.constant 0 : i32
    return %c0_i32, %c0_i32_0, %c0_i32_1 : i32, i32, i32
  }
  func.func @transform_4(%arg0: i32, %arg1: i32) -> (i32, i32) {
    %c0_i32 = arith.constant 0 : i32
    %c0_i32_0 = arith.constant 0 : i32
    %c0_i32_1 = arith.constant 0 : i32
    return %c0_i32, %c0_i32_0 : i32, i32
  }
  func.func @transform_5(%arg0: i32, %arg1: i32) -> (i32, i32) {
    %c0_i32 = arith.constant 0 : i32
    %c0_i32_0 = arith.constant 0 : i32
    %c0_i32_1 = arith.constant 0 : i32
    return %c0_i32, %c0_i32_0 : i32, i32
  }
  func.func @transform_6(%arg0: i32, %arg1: i32) -> (i32, i32) {
    %c0_i32 = arith.constant 0 : i32
    %c0_i32_0 = arith.constant 0 : i32
    %c0_i32_1 = arith.constant 0 : i32
    return %c0_i32, %c0_i32_0 : i32, i32
  }
  func.func @transform_7(%arg0: i32, %arg1: i32) -> (i32, i32, i32) {
    %c0_i32 = arith.constant 0 : i32
    %c0_i32_0 = arith.constant 0 : i32
    return %arg0, %c0_i32, %arg1 : i32, i32, i32
  }
}

</mosaic_0001>

<llo_original>
// kernel: tpu_custom_call.1
$region0: #{tpu_custom_call.1}
  #allocation0 [shape = 'u32[]', space=smem, size = 0x4, offset = 0x4, fixed_abs, tag = 'smem constant byte address 0x4 - core index']
  #allocation1 [shape = 'u32[144,128]{1,0:T(1,128)}', space=vmem, size = 0x12000, scoped, tag = 'internal scratch']
  #allocation2 [shape = 'bf16[4,4]{1,0:T(4,128)(2,1)}', space=vmem, size = 0x400, scoped, tag = 'scratch operand']
  #allocation3 [shape = 'bf16[8,4]{1,0:T(8,128)(2,1)}', space=vmem, size = 0x800, scoped, tag = 'scratch operand']
  %s0 = inlined_call_operand.vmem [shape: bf16[2,4,16], index: 0, kind: input, shape index: {}]
  %s1 = inlined_call_operand.vmem [shape: bf16[3,8,4], index: 1, kind: input, shape index: {}]
  %s2 = inlined_call_operand.vmem [shape: f32[8,1], index: 2, kind: input, shape index: {}]
  %s3 = inlined_call_operand.vmem [shape: bf16[3,8,8], index: 3, kind: input, shape index: {}]
  %s4 = inlined_call_operand.vmem [shape: f32[8,1], index: 4, kind: input, shape index: {}]
  %s5 = inlined_call_operand.vmem [shape: bf16[8,4], index: 5, kind: input, shape index: {}]
  %s6 = inlined_call_operand.vmem [shape: f32[8,1], index: 6, kind: input, shape index: {}]
  %s7 = inlined_call_operand.hbm [shape: f32[2,8,16], index: 7, kind: output, shape index: {}]
  %s8 = sld [smem:[#allocation0]]
  $region65: #{tpu_custom_call.1} parent=0
    _
  %s10 = ssub.s32 1, %s8
  %s11 = scalar_select 0, %s10, %s8
  $region1: #{tpu_custom_call.1} parent=0
    #allocation4 [shape = 'u8[8192]{0}', space=vmem, size = 0x2000, scoped, tag = 'output window, operand 0']
    #allocation5 [shape = 's32[2]{0}', space=sflag, size = 0x8, scoped, tag = 'scoped memory for tpu_custom_call.1']
    %12 = vsyncpa [#allocation5], 0
    %s13 = scalar_lea.sflag [#allocation5], 1
    %14 = vsyncpa %s13, 0
    loop: start=0, step=1, limit=4
    $region2: #{tpu_custom_call.1} parent=1 // loop_pre_header
      _
    $region3: #{tpu_custom_call.1} parent=1 // loop_header
      %s16 = sphi 0, %s20
      %p17 = scmp.ge.s32.totalorder %s16, 4
      %s23 = sphi 0, %s35
      %s24 = sphi 0, %s31
      %s25 = sphi 0, %s23
      %s26 = sphi 0, %s24
      %s27 = sphi 0, %s25
      %s28 = sphi 0, %s26
      %s40 = sphi 0, %s42
      %s43 = sphi 0, %s40
      %s44 = sphi 0, %s43
      %s60 = sphi 0, %s44
      %s64 = sphi 0, %s64
      %s66 = sphi 0, %s64
      %s67 = sphi 0, %s66
      %s81 = sphi 0, %s67
      %s85 = sphi 0, %s85
      %s87 = sphi 0, %s85
      %s88 = sphi 0, %s87
      %s102 = sphi 0, %s88
      %s106 = sphi 0, %s106
      %s108 = sphi 0, %s106
      %s109 = sphi 0, %s108
      %s123 = sphi 0, %s109
      %s127 = sphi 0, %s127
      %s129 = sphi 0, %s127
      %s130 = sphi 0, %s129
      %s144 = sphi 0, %s130
      %s148 = sphi 0, %s148
      %s150 = sphi 0, %s148
      %s151 = sphi 0, %s150
      %s165 = sphi 0, %s151
      %s169 = sphi 0, %s169
      %s171 = sphi 0, %s169
      %s172 = sphi 0, %s171
      %s186 = sphi 0, %s172
      %s194 = sphi 0, %s196
      %s197 = sphi 0, %s194
      %s198 = sphi 0, %s197
      %s214 = sphi 0, %s198
    $region4: #{tpu_custom_call.1} parent=1 // loop_header_branch
      %19 = sbr.rel (%p17) target = $region8
    $region5: #{tpu_custom_call.1} parent=1 // loop_body
      %s21 = ssub.s32 %s16, 1
      %s22 = ssub.s32 %s16, 2
      %s29 = sadd.s32 1, %s24
      %p30 = scmp.ge.s32.totalorder %s29, 1
      %s31 = scalar_select %p30, 0, %s29
      %s32 = sadd.s32 1, %s23
      %s33 = scalar_select %p30, %s32, %s23
      %p34 = scmp.ge.s32.totalorder %s33, 2
      %s35 = scalar_select %p34, 0, %s33
      %s36 = ssub.s32 %s23, %s35
      %s37 = ssub.s32 %s24, %s31
      %s38 = sor.u32 %s36, %s37
      %p39 = scmp.eq.s32.totalorder %s38, 0
      %s41 = sadd.s32 %s40, 1
      %s42 = scalar_select %p39, %s40, %s41
      %p45 = pneg %p39
      %p46 = scmp.eq.s32.totalorder %s16, 1
      %p47 = por %p45, %p46
      %p48 = scmp.ne.s32.totalorder %s40, %s43
      %p49 = scmp.eq.s32.totalorder %s16, 0
      %p50 = por %p48, %p49
      %p51 = scmp.ne.s32.totalorder %s40, %s43
      %p52 = scmp.eq.s32.totalorder %s21, 1
      %p53 = por %p51, %p52
      %p54 = scmp.ne.s32.totalorder %s43, %s44
      %p55 = scmp.eq.s32.totalorder %s21, 0
      %p56 = por %p54, %p55
      %p57 = scmp.ne.s32.totalorder %s43, %s44
      %p58 = scmp.eq.s32.totalorder %s22, 1
      %p59 = por %p57, %p58
      %p61 = scmp.ne.s32.totalorder %s44, %s60
      %p62 = scmp.eq.s32.totalorder %s22, 0
      %p63 = por %p61, %p62
      %s65 = sadd.s32 %s64, 1
      %p68 = scmp.eq.s32.totalorder %s16, 1
      %p69 = scmp.ne.s32.totalorder %s64, %s66
      %p70 = scmp.eq.s32.totalorder %s16, 0
      %p71 = por %p69, %p70
      %p72 = scmp.ne.s32.totalorder %s64, %s66
      %p73 = scmp.eq.s32.totalorder %s21, 1
      %p74 = por %p72, %p73
      %p75 = scmp.ne.s32.totalorder %s66, %s67
      %p76 = scmp.eq.s32.totalorder %s21, 0
      %p77 = por %p75, %p76
      %p78 = scmp.ne.s32.totalorder %s66, %s67
      %p79 = scmp.eq.s32.totalorder %s22, 1
      %p80 = por %p78, %p79
      %p82 = scmp.ne.s32.totalorder %s67, %s81
      %p83 = scmp.eq.s32.totalorder %s22, 0
      %p84 = por %p82, %p83
      %s86 = sadd.s32 %s85, 1
      %p89 = scmp.eq.s32.totalorder %s16, 1
      %p90 = scmp.ne.s32.totalorder %s85, %s87
      %p91 = scmp.eq.s32.totalorder %s16, 0
      %p92 = por %p90, %p91
      %p93 = scmp.ne.s32.totalorder %s85, %s87
      %p94 = scmp.eq.s32.totalorder %s21, 1
      %p95 = por %p93, %p94
      %p96 = scmp.ne.s32.totalorder %s87, %s88
      %p97 = scmp.eq.s32.totalorder %s21, 0
      %p98 = por %p96, %p97
      %p99 = scmp.ne.s32.totalorder %s87, %s88
      %p100 = scmp.eq.s32.totalorder %s22, 1
      %p101 = por %p99, %p100
      %p103 = scmp.ne.s32.totalorder %s88, %s102
      %p104 = scmp.eq.s32.totalorder %s22, 0
      %p105 = por %p103, %p104
      %s107 = sadd.s32 %s106, 1
      %p110 = scmp.eq.s32.totalorder %s16, 1
      %p111 = scmp.ne.s32.totalorder %s106, %s108
      %p112 = scmp.eq.s32.totalorder %s16, 0
      %p113 = por %p111, %p112
      %p114 = scmp.ne.s32.totalorder %s106, %s108
      %p115 = scmp.eq.s32.totalorder %s21, 1
      %p116 = por %p114, %p115
      %p117 = scmp.ne.s32.totalorder %s108, %s109
      %p118 = scmp.eq.s32.totalorder %s21, 0
      %p119 = por %p117, %p118
      %p120 = scmp.ne.s32.totalorder %s108, %s109
      %p121 = scmp.eq.s32.totalorder %s22, 1
      %p122 = por %p120, %p121
      %p124 = scmp.ne.s32.totalorder %s109, %s123
      %p125 = scmp.eq.s32.totalorder %s22, 0
      %p126 = por %p124, %p125
      %s128 = sadd.s32 %s127, 1
      %p131 = scmp.eq.s32.totalorder %s16, 1
      %p132 = scmp.ne.s32.totalorder %s127, %s129
      %p133 = scmp.eq.s32.totalorder %s16, 0
      %p134 = por %p132, %p133
      %p135 = scmp.ne.s32.totalorder %s127, %s129
      %p136 = scmp.eq.s32.totalorder %s21, 1
      %p137 = por %p135, %p136
      %p138 = scmp.ne.s32.totalorder %s129, %s130
      %p139 = scmp.eq.s32.totalorder %s21, 0
      %p140 = por %p138, %p139
      %p141 = scmp.ne.s32.totalorder %s129, %s130
      %p142 = scmp.eq.s32.totalorder %s22, 1
      %p143 = por %p141, %p142
      %p145 = scmp.ne.s32.totalorder %s130, %s144
      %p146 = scmp.eq.s32.totalorder %s22, 0
      %p147 = por %p145, %p146
      %s149 = sadd.s32 %s148, 1
      %p152 = scmp.eq.s32.totalorder %s16, 1
      %p153 = scmp.ne.s32.totalorder %s148, %s150
      %p154 = scmp.eq.s32.totalorder %s16, 0
      %p155 = por %p153, %p154
      %p156 = scmp.ne.s32.totalorder %s148, %s150
      %p157 = scmp.eq.s32.totalorder %s21, 1
      %p158 = por %p156, %p157
      %p159 = scmp.ne.s32.totalorder %s150, %s151
      %p160 = scmp.eq.s32.totalorder %s21, 0
      %p161 = por %p159, %p160
      %p162 = scmp.ne.s32.totalorder %s150, %s151
      %p163 = scmp.eq.s32.totalorder %s22, 1
      %p164 = por %p162, %p163
      %p166 = scmp.ne.s32.totalorder %s151, %s165
      %p167 = scmp.eq.s32.totalorder %s22, 0
      %p168 = por %p166, %p167
      %s170 = sadd.s32 %s169, 1
      %p173 = scmp.eq.s32.totalorder %s16, 1
      %p174 = scmp.ne.s32.totalorder %s169, %s171
      %p175 = scmp.eq.s32.totalorder %s16, 0
      %p176 = por %p174, %p175
      %p177 = scmp.ne.s32.totalorder %s169, %s171
      %p178 = scmp.eq.s32.totalorder %s21, 1
      %p179 = por %p177, %p178
      %p180 = scmp.ne.s32.totalorder %s171, %s172
      %p181 = scmp.eq.s32.totalorder %s21, 0
      %p182 = por %p180, %p181
      %p183 = scmp.ne.s32.totalorder %s171, %s172
      %p184 = scmp.eq.s32.totalorder %s22, 1
      %p185 = por %p183, %p184
      %p187 = scmp.ne.s32.totalorder %s172, %s186
      %p188 = scmp.eq.s32.totalorder %s22, 0
      %p189 = por %p187, %p188
      %s190 = ssub.s32 %s23, %s35
      %s191 = ssub.s32 %s24, %s31
      %s192 = sor.u32 %s190, %s191
      %p193 = scmp.eq.s32.totalorder %s192, 0
      %s195 = sadd.s32 %s194, 1
      %s196 = scalar_select %p193, %s194, %s195
      %p199 = pneg %p193
      %p200 = scmp.eq.s32.totalorder %s16, 1
      %p201 = por %p199, %p200
      %p202 = scmp.ne.s32.totalorder %s194, %s197
      %p203 = scmp.eq.s32.totalorder %s16, 0
      %p204 = por %p202, %p203
      %p205 = scmp.ne.s32.totalorder %s194, %s197
      %p206 = scmp.eq.s32.totalorder %s21, 1
      %p207 = por %p205, %p206
      %p208 = scmp.ne.s32.totalorder %s197, %s198
      %p209 = scmp.eq.s32.totalorder %s21, 0
      %p210 = por %p208, %p209
      %p211 = scmp.ne.s32.totalorder %s197, %s198
      %p212 = scmp.eq.s32.totalorder %s22, 1
      %p213 = por %p211, %p212
      %p215 = scmp.ne.s32.totalorder %s198, %s214
      %p216 = scmp.eq.s32.totalorder %s22, 0
      %p217 = por %p215, %p216
      %p218 = scmp.le.s32.totalorder 1, %s16
      %p219 = scmp.lt.s32.totalorder %s16, 3
      %p220 = pnand %p218, %p219
      %p221 = pneg %p220
      // Predicated region
      $region9: #{tpu_custom_call.1} parent=5 // pred_check
        _
      $region10: #{tpu_custom_call.1} parent=5 // pred_check_branch
        %223 = sbr.rel (%p220) target = $region12
      $region11: #{tpu_custom_call.1} parent=5 // pred_region
        %s224 = ssub.s32 %s16, 1
        // Predicated region
        $region13: #{tpu_custom_call.1} parent=11 // pred_check
          %p225 = pneg %p77
        $region14: #{tpu_custom_call.1} parent=11 // pred_check_branch
          %227 = sbr.rel (%p225) target = $region16
        $region15: #{tpu_custom_call.1} parent=11 // pred_region
          _
        $region16: #{tpu_custom_call.1} parent=11 // pred_fallthru
          _
        // Predicated region
        $region17: #{tpu_custom_call.1} parent=11 // pred_check
          %p228 = pneg %p98
        $region18: #{tpu_custom_call.1} parent=11 // pred_check_branch
          %230 = sbr.rel (%p228) target = $region20
        $region19: #{tpu_custom_call.1} parent=11 // pred_region
          _
        $region20: #{tpu_custom_call.1} parent=11 // pred_fallthru
          _
        // Predicated region
        $region21: #{tpu_custom_call.1} parent=11 // pred_check
          %p231 = pneg %p119
        $region22: #{tpu_custom_call.1} parent=11 // pred_check_branch
          %233 = sbr.rel (%p231) target = $region24
        $region23: #{tpu_custom_call.1} parent=11 // pred_region
          _
        $region24: #{tpu_custom_call.1} parent=11 // pred_fallthru
          _
        // Predicated region
        $region25: #{tpu_custom_call.1} parent=11 // pred_check
          %p234 = pneg %p140
        $region26: #{tpu_custom_call.1} parent=11 // pred_check_branch
          %236 = sbr.rel (%p234) target = $region28
        $region27: #{tpu_custom_call.1} parent=11 // pred_region
          _
        $region28: #{tpu_custom_call.1} parent=11 // pred_fallthru
          _
        // Predicated region
        $region29: #{tpu_custom_call.1} parent=11 // pred_check
          %p237 = pneg %p161
        $region30: #{tpu_custom_call.1} parent=11 // pred_check_branch
          %239 = sbr.rel (%p237) target = $region32
        $region31: #{tpu_custom_call.1} parent=11 // pred_region
          _
        $region32: #{tpu_custom_call.1} parent=11 // pred_fallthru
          _
        // Predicated region
        $region33: #{tpu_custom_call.1} parent=11 // pred_check
          %p240 = pneg %p182
        $region34: #{tpu_custom_call.1} parent=11 // pred_check_branch
          %242 = sbr.rel (%p240) target = $region36
        $region35: #{tpu_custom_call.1} parent=11 // pred_region
          _
        $region36: #{tpu_custom_call.1} parent=11 // pred_fallthru
          _
      $region12: #{tpu_custom_call.1} parent=5 // pred_fallthru
        _
      %p243 = scmp.lt.s32.totalorder %s16, 2
      // Predicated region
      $region37: #{tpu_custom_call.1} parent=5 // pred_check
        %p244 = pneg %p243
      $region38: #{tpu_custom_call.1} parent=5 // pred_check_branch
        %246 = sbr.rel (%p244) target = $region40
      $region39: #{tpu_custom_call.1} parent=5 // pred_region
        // Predicated region
        $region41: #{tpu_custom_call.1} parent=39 // pred_check
          %p247 = pneg %p50
        $region42: #{tpu_custom_call.1} parent=39 // pred_check_branch
          %249 = sbr.rel (%p247) target = $region44
        $region43: #{tpu_custom_call.1} parent=39 // pred_region
          %p250 = scmp.lt.s32.totalorder %s23, 1
          %s251 = scalar_select %p250, %s23, 1
          %p252 = scmp.lt.s32.totalorder %s24, 0
          %s253 = scalar_select %p252, %s24, 0
          %s254 = sadd.s32 %s253, %s251
          %s255 = smul.addr %s254, 2
          %s256 = scalar_lea.vmem %s0, %s255
        $region44: #{tpu_custom_call.1} parent=39 // pred_fallthru
          _
      $region40: #{tpu_custom_call.1} parent=5 // pred_fallthru
        _
      %p257 = scmp.le.s32.totalorder 1, %s16
      %p258 = scmp.lt.s32.totalorder %s16, 3
      %p259 = pnand %p257, %p258
      %p260 = pneg %p259
      // Predicated region
      $region45: #{tpu_custom_call.1} parent=5 // pred_check
        _
      $region46: #{tpu_custom_call.1} parent=5 // pred_check_branch
        %262 = sbr.rel (%p259) target = $region48
      $region47: #{tpu_custom_call.1} parent=5 // pred_region
        %s263 = ssub.s32 %s16, 1
        %p264 = scmp.lt.s32.totalorder %s25, 1
        %s265 = scalar_select %p264, %s25, 1
        %p266 = scmp.lt.s32.totalorder %s26, 0
        %s267 = scalar_select %p266, %s26, 0
        %s268 = sadd.s32 %s267, %s265
        %s269 = smul.addr %s268, 2
        %s270 = scalar_lea.vmem %s0, %s269
        %p271 = pneg %p56
        %p272 = pneg %p53
        %p273 = pneg %p77
        %p274 = pneg %p74
        %p275 = pneg %p98
        %p276 = pneg %p95
        %p277 = pneg %p119
        %p278 = pneg %p116
        %p279 = pneg %p140
        %p280 = pneg %p137
        %p281 = pneg %p161
        %p282 = pneg %p158
        %p283 = pneg %p182
        %p284 = pneg %p179
        %p285 = pneg %p210
        %p286 = pneg %p207
        %s287 = sand.u32 %s197, 1
        %s288 = scalar_lea.sflag [#allocation5], %s287
        %s289 = sand.u32 %s197, 1
        %s290 = smul.addr %s289, 8
        %s291 = scalar_lea.vmem [#allocation4], %s290
        %p292 = scmp.lt.s32.totalorder %s25, 1
        %s293 = scalar_select %p292, %s25, 1
        %p294 = scmp.lt.s32.totalorder %s26, 0
        %s295 = scalar_select %p294, %s26, 0
        %s296 = sadd.s32 %s295, %s293
        %s297 = smul.addr %s296, 2
        %s298 = scalar_lea.vmem %s0, %s297
        %p300 = scmp.eq.s32.totalorder %s26, 0
        // Predicated region
        $region49: #{tpu_custom_call.1} parent=47 // pred_check
          %p301 = pneg %p300
        $region50: #{tpu_custom_call.1} parent=47 // pred_check_branch
          %303 = sbr.rel (%p301) target = $region52
        $region51: #{tpu_custom_call.1} parent=47 // pred_region
          %vm304 = vcmask 25600
          %305 = vst.msk [vmem:[#allocation2] sm:$0x3] %vm304, 0
          %vm306 = vcmask 27648
          %307 = vst.msk [vmem:[#allocation3] sm:$0xf] %vm306, 0
        $region52: #{tpu_custom_call.1} parent=47 // pred_fallthru
          _
        %v308 = vld [vmem:[%s298] sm:$0x3]
        %v309 = vld [vmem:[#allocation2] sm:$0x3]
        %v312 = vunpack.c.l.s4 1983009808
        %v313 = vunpack.c.0.s8 %v312
        %v314 = vlaneseq
        %v315 = vshrl.u32 %v314, 7
        %v316 = vsub.s32 %v313, %v315
        %v317 = vrot.slane %v308, %v316
        %318 = vrot.lane.b32.xlu0 %v317, 4
        %v319 = vpop.permute.xlu0 %318
        %vm320 = vcmask 31744
        %v323 = vsel %vm320, %v309, %v319
        %v324 = vld [vmem:[%s1] sm:$0xf]
        %s325 = scalar_lea.vmem %s1, 4
        %v326 = vld [vmem:[%s325] sm:$0xf]
        %328 = vrot.lane.b32.xlu0 %v323, 126
        %v329 = vpop.permute.xlu0 %328
        %v331 = vsel %vm320, %v326, 0
        %vm333 = vcmask 1041408
        %v335 = vsel %vm333, %v329, 0
        %337 = vmatprep.subr.bf16.mxu0 0
        %338 = vmatpush1.bf16.msra.mxu0 0
        %339 = vmatprep.subr.bf16.mxu0 0
        %340 = vmatpush1.bf16.msra.mxu0 0
        %341 = vmatprep.subr.bf16.mxu0 0
        %342 = vmatpush1.bf16.msra.mxu0 0
        %343 = vmatprep.subr.bf16.mxu0 0
        %344 = vmatpush1.bf16.msra.mxu0 0
        %345 = vmatprep.subr.bf16.mxu0 0
        %346 = vmatpush1.bf16.msra.mxu0 0
        %347 = vmatprep.subr.bf16.mxu0 0
        %348 = vmatpush1.bf16.msra.mxu0 0
        %349 = vmatprep.subr.bf16.mxu0 0
        %350 = vmatpush1.bf16.msra.mxu0 0
        %351 = vmatprep.subr.bf16.mxu0 0
        %352 = vmatpush1.bf16.msra.mxu0 %v335
        %353 = vmatprep.subr.bf16.mxu0 0
        %354 = vmatpush2.bf16.msra.mxu0 0
        %355 = vmatprep.subr.bf16.mxu0 0
        %356 = vmatpush2.bf16.msra.mxu0 0
        %357 = vmatprep.subr.bf16.mxu0 0
        %358 = vmatpush2.bf16.msra.mxu0 0
        %359 = vmatprep.subr.bf16.mxu0 0
        %360 = vmatpush2.bf16.msra.mxu0 0
        %361 = vmatprep.subr.bf16.mxu0 0
        %362 = vmatpush2.bf16.msra.mxu0 0
        %363 = vmatprep.subr.bf16.mxu0 0
        %364 = vmatpush2.bf16.msra.mxu0 0
        %365 = vmatprep.subr.bf16.mxu0 0
        %366 = vmatpush2.bf16.msra.mxu0 0
        %367 = vmatprep.subr.bf16.mxu0 0
        %368 = vmatpush2.bf16.msra.mxu0 0
        %369 = vmatprep.mubr.bf16.mxu0 0
        %370 = vmatmul.mubr.bf16.gmra.mxu0 %v331
        %v371 = vpop.f32.mrf.mxu0
        %v372 = vadd.f32 0.0, %v371
        %v373 = vpop.f32.mrf.mxu0
        %v374 = vpop.f32.mrf.mxu0
        %v375 = vpop.f32.mrf.mxu0
        %376 = vdwg.mxu0
        %v378 = vsel %vm320, %v324, 0
        %v380 = vsel %vm333, %v323, 0
        %382 = vmatprep.subr.bf16.mxu0 0
        %383 = vmatpush1.bf16.msra.mxu0 0
        %384 = vmatprep.subr.bf16.mxu0 0
        %385 = vmatpush1.bf16.msra.mxu0 0
        %386 = vmatprep.subr.bf16.mxu0 0
        %387 = vmatpush1.bf16.msra.mxu0 0
        %388 = vmatprep.subr.bf16.mxu0 0
        %389 = vmatpush1.bf16.msra.mxu0 0
        %390 = vmatprep.subr.bf16.mxu0 0
        %391 = vmatpush1.bf16.msra.mxu0 0
        %392 = vmatprep.subr.bf16.mxu0 0
        %393 = vmatpush1.bf16.msra.mxu0 0
        %394 = vmatprep.subr.bf16.mxu0 0
        %395 = vmatpush1.bf16.msra.mxu0 0
        %396 = vmatprep.subr.bf16.mxu0 0
        %397 = vmatpush1.bf16.msra.mxu0 %v380
        %398 = vmatprep.subr.bf16.mxu0 0
        %399 = vmatpush2.bf16.msra.mxu0 0
        %400 = vmatprep.subr.bf16.mxu0 0
        %401 = vmatpush2.bf16.msra.mxu0 0
        %402 = vmatprep.subr.bf16.mxu0 0
        %403 = vmatpush2.bf16.msra.mxu0 0
        %404 = vmatprep.subr.bf16.mxu0 0
        %405 = vmatpush2.bf16.msra.mxu0 0
        %406 = vmatprep.subr.bf16.mxu0 0
        %407 = vmatpush2.bf16.msra.mxu0 0
        %408 = vmatprep.subr.bf16.mxu0 0
        %409 = vmatpush2.bf16.msra.mxu0 0
        %410 = vmatprep.subr.bf16.mxu0 0
        %411 = vmatpush2.bf16.msra.mxu0 0
        %412 = vmatprep.subr.bf16.mxu0 0
        %413 = vmatpush2.bf16.msra.mxu0 0
        %414 = vmatprep.mubr.bf16.mxu0 0
        %415 = vmatmul.mubr.bf16.gmra.mxu0 %v378
        %v416 = vpop.f32.mrf.mxu0
        %v417 = vadd.f32 %v372, %v416
        %v418 = vpop.f32.mrf.mxu0
        %v419 = vpop.f32.mrf.mxu0
        %v420 = vpop.f32.mrf.mxu0
        %421 = vdwg.mxu0
        %s422 = scalar_lea.vmem %s1, 8
        %v423 = vld [vmem:[%s422] sm:$0xf]
        %424 = vrot.lane.b32.xlu0 %v323, 124
        %v425 = vpop.permute.xlu0 %424
        %v427 = vsel %vm320, %v423, 0
        %v430 = vsel %vm333, %v425, 0
        %432 = vmatprep.subr.bf16.mxu0 0
        %433 = vmatpush1.bf16.msra.mxu0 0
        %434 = vmatprep.subr.bf16.mxu0 0
        %435 = vmatpush1.bf16.msra.mxu0 0
        %436 = vmatprep.subr.bf16.mxu0 0
        %437 = vmatpush1.bf16.msra.mxu0 0
        %438 = vmatprep.subr.bf16.mxu0 0
        %439 = vmatpush1.bf16.msra.mxu0 0
        %440 = vmatprep.subr.bf16.mxu0 0
        %441 = vmatpush1.bf16.msra.mxu0 0
        %442 = vmatprep.subr.bf16.mxu0 0
        %443 = vmatpush1.bf16.msra.mxu0 0
        %444 = vmatprep.subr.bf16.mxu0 0
        %445 = vmatpush1.bf16.msra.mxu0 0
        %446 = vmatprep.subr.bf16.mxu0 0
        %447 = vmatpush1.bf16.msra.mxu0 %v430
        %448 = vmatprep.subr.bf16.mxu0 0
        %449 = vmatpush2.bf16.msra.mxu0 0
        %450 = vmatprep.subr.bf16.mxu0 0
        %451 = vmatpush2.bf16.msra.mxu0 0
        %452 = vmatprep.subr.bf16.mxu0 0
        %453 = vmatpush2.bf16.msra.mxu0 0
        %454 = vmatprep.subr.bf16.mxu0 0
        %455 = vmatpush2.bf16.msra.mxu0 0
        %456 = vmatprep.subr.bf16.mxu0 0
        %457 = vmatpush2.bf16.msra.mxu0 0
        %458 = vmatprep.subr.bf16.mxu0 0
        %459 = vmatpush2.bf16.msra.mxu0 0
        %460 = vmatprep.subr.bf16.mxu0 0
        %461 = vmatpush2.bf16.msra.mxu0 0
        %462 = vmatprep.subr.bf16.mxu0 0
        %463 = vmatpush2.bf16.msra.mxu0 0
        %464 = vmatprep.mubr.bf16.mxu0 0
        %465 = vmatmul.mubr.bf16.gmra.mxu0 %v427
        %v466 = vpop.f32.mrf.mxu0
        %v467 = vadd.f32 0.0, %v466
        %v468 = vpop.f32.mrf.mxu0
        %v469 = vpop.f32.mrf.mxu0
        %v470 = vpop.f32.mrf.mxu0
        %471 = vdwg.mxu0
        %v472 = vadd.f32 %v417, %v467
        %v473 = vld [vmem:[%s2] sm:$0xff]
        %475 = vset.pattern.permute.xlu0 0
        %476 = vperm.xlu0 %475, %v473
        %v477 = vpop.permute.xlu0 %476
        %v479 = vadd.f32 %v472, %v477
        %v480 = vmax.f32 %v479, 0.0
        %v481 = vpack.c.bf16 %v480, %v480
        %v482 = vld [vmem:[#allocation3] sm:$0xf]
        %484 = vrot.lane.b32.xlu0 %v481, 4
        %v485 = vpop.permute.xlu0 %484
        %v488 = vsel %vm320, %v482, %v485
        %v489 = vld [vmem:[%s3] sm:$0xf]
        %s490 = scalar_lea.vmem %s3, 4
        %v491 = vld [vmem:[%s490] sm:$0xf]
        %493 = vrot.lane.b32.xlu0 %v488, 126
        %v494 = vpop.permute.xlu0 %493
        %vm495 = vcmask 64512
        %v497 = vsel %vm495, %v491, 0
        %vm499 = vcmask 1043456
        %v501 = vsel %vm499, %v494, 0
        %503 = vmatprep.subr.bf16.mxu0 0
        %504 = vmatpush1.bf16.msra.mxu0 0
        %505 = vmatprep.subr.bf16.mxu0 0
        %506 = vmatpush1.bf16.msra.mxu0 0
        %507 = vmatprep.subr.bf16.mxu0 0
        %508 = vmatpush1.bf16.msra.mxu0 0
        %509 = vmatprep.subr.bf16.mxu0 0
        %510 = vmatpush1.bf16.msra.mxu0 0
        %511 = vmatprep.subr.bf16.mxu0 0
        %512 = vmatpush1.bf16.msra.mxu0 0
        %513 = vmatprep.subr.bf16.mxu0 0
        %514 = vmatpush1.bf16.msra.mxu0 0
        %515 = vmatprep.subr.bf16.mxu0 0
        %516 = vmatpush1.bf16.msra.mxu0 0
        %517 = vmatprep.subr.bf16.mxu0 0
        %518 = vmatpush1.bf16.msra.mxu0 %v501
        %519 = vmatprep.subr.bf16.mxu0 0
        %520 = vmatpush2.bf16.msra.mxu0 0
        %521 = vmatprep.subr.bf16.mxu0 0
        %522 = vmatpush2.bf16.msra.mxu0 0
        %523 = vmatprep.subr.bf16.mxu0 0
        %524 = vmatpush2.bf16.msra.mxu0 0
        %525 = vmatprep.subr.bf16.mxu0 0
        %526 = vmatpush2.bf16.msra.mxu0 0
        %527 = vmatprep.subr.bf16.mxu0 0
        %528 = vmatpush2.bf16.msra.mxu0 0
        %529 = vmatprep.subr.bf16.mxu0 0
        %530 = vmatpush2.bf16.msra.mxu0 0
        %531 = vmatprep.subr.bf16.mxu0 0
        %532 = vmatpush2.bf16.msra.mxu0 0
        %533 = vmatprep.subr.bf16.mxu0 0
        %534 = vmatpush2.bf16.msra.mxu0 0
        %535 = vmatprep.mubr.bf16.mxu0 0
        %536 = vmatmul.mubr.bf16.gmra.mxu0 %v497
        %v537 = vpop.f32.mrf.mxu0
        %v538 = vadd.f32 0.0, %v537
        %v539 = vpop.f32.mrf.mxu0
        %v540 = vpop.f32.mrf.mxu0
        %v541 = vpop.f32.mrf.mxu0
        %542 = vdwg.mxu0
        %v544 = vsel %vm495, %v489, 0
        %v546 = vsel %vm499, %v488, 0
        %548 = vmatprep.subr.bf16.mxu0 0
        %549 = vmatpush1.bf16.msra.mxu0 0
        %550 = vmatprep.subr.bf16.mxu0 0
        %551 = vmatpush1.bf16.msra.mxu0 0
        %552 = vmatprep.subr.bf16.mxu0 0
        %553 = vmatpush1.bf16.msra.mxu0 0
        %554 = vmatprep.subr.bf16.mxu0 0
        %555 = vmatpush1.bf16.msra.mxu0 0
        %556 = vmatprep.subr.bf16.mxu0 0
        %557 = vmatpush1.bf16.msra.mxu0 0
        %558 = vmatprep.subr.bf16.mxu0 0
        %559 = vmatpush1.bf16.msra.mxu0 0
        %560 = vmatprep.subr.bf16.mxu0 0
        %561 = vmatpush1.bf16.msra.mxu0 0
        %562 = vmatprep.subr.bf16.mxu0 0
        %563 = vmatpush1.bf16.msra.mxu0 %v546
        %564 = vmatprep.subr.bf16.mxu0 0
        %565 = vmatpush2.bf16.msra.mxu0 0
        %566 = vmatprep.subr.bf16.mxu0 0
        %567 = vmatpush2.bf16.msra.mxu0 0
        %568 = vmatprep.subr.bf16.mxu0 0
        %569 = vmatpush2.bf16.msra.mxu0 0
        %570 = vmatprep.subr.bf16.mxu0 0
        %571 = vmatpush2.bf16.msra.mxu0 0
        %572 = vmatprep.subr.bf16.mxu0 0
        %573 = vmatpush2.bf16.msra.mxu0 0
        %574 = vmatprep.subr.bf16.mxu0 0
        %575 = vmatpush2.bf16.msra.mxu0 0
        %576 = vmatprep.subr.bf16.mxu0 0
        %577 = vmatpush2.bf16.msra.mxu0 0
        %578 = vmatprep.subr.bf16.mxu0 0
        %579 = vmatpush2.bf16.msra.mxu0 0
        %580 = vmatprep.mubr.bf16.mxu0 0
        %581 = vmatmul.mubr.bf16.gmra.mxu0 %v544
        %v582 = vpop.f32.mrf.mxu0
        %v583 = vadd.f32 %v538, %v582
        %v584 = vpop.f32.mrf.mxu0
        %v585 = vpop.f32.mrf.mxu0
        %v586 = vpop.f32.mrf.mxu0
        %587 = vdwg.mxu0
        %s588 = scalar_lea.vmem %s3, 8
        %v589 = vld [vmem:[%s588] sm:$0xf]
        %590 = vrot.lane.b32.xlu0 %v488, 124
        %v591 = vpop.permute.xlu0 %590
        %v593 = vsel %vm495, %v589, 0
        %v596 = vsel %vm499, %v591, 0
        %598 = vmatprep.subr.bf16.mxu0 0
        %599 = vmatpush1.bf16.msra.mxu0 0
        %600 = vmatprep.subr.bf16.mxu0 0
        %601 = vmatpush1.bf16.msra.mxu0 0
        %602 = vmatprep.subr.bf16.mxu0 0
        %603 = vmatpush1.bf16.msra.mxu0 0
        %604 = vmatprep.subr.bf16.mxu0 0
        %605 = vmatpush1.bf16.msra.mxu0 0
        %606 = vmatprep.subr.bf16.mxu0 0
        %607 = vmatpush1.bf16.msra.mxu0 0
        %608 = vmatprep.subr.bf16.mxu0 0
        %609 = vmatpush1.bf16.msra.mxu0 0
        %610 = vmatprep.subr.bf16.mxu0 0
        %611 = vmatpush1.bf16.msra.mxu0 0
        %612 = vmatprep.subr.bf16.mxu0 0
        %613 = vmatpush1.bf16.msra.mxu0 %v596
        %614 = vmatprep.subr.bf16.mxu0 0
        %615 = vmatpush2.bf16.msra.mxu0 0
        %616 = vmatprep.subr.bf16.mxu0 0
        %617 = vmatpush2.bf16.msra.mxu0 0
        %618 = vmatprep.subr.bf16.mxu0 0
        %619 = vmatpush2.bf16.msra.mxu0 0
        %620 = vmatprep.subr.bf16.mxu0 0
        %621 = vmatpush2.bf16.msra.mxu0 0
        %622 = vmatprep.subr.bf16.mxu0 0
        %623 = vmatpush2.bf16.msra.mxu0 0
        %624 = vmatprep.subr.bf16.mxu0 0
        %625 = vmatpush2.bf16.msra.mxu0 0
        %626 = vmatprep.subr.bf16.mxu0 0
        %627 = vmatpush2.bf16.msra.mxu0 0
        %628 = vmatprep.subr.bf16.mxu0 0
        %629 = vmatpush2.bf16.msra.mxu0 0
        %630 = vmatprep.mubr.bf16.mxu0 0
        %631 = vmatmul.mubr.bf16.gmra.mxu0 %v593
        %v632 = vpop.f32.mrf.mxu0
        %v633 = vadd.f32 0.0, %v632
        %v634 = vpop.f32.mrf.mxu0
        %v635 = vpop.f32.mrf.mxu0
        %v636 = vpop.f32.mrf.mxu0
        %637 = vdwg.mxu0
        %v638 = vadd.f32 %v583, %v633
        %v639 = vld [vmem:[%s4] sm:$0xff]
        %641 = vset.pattern.permute.xlu0 0
        %642 = vperm.xlu0 %641, %v639
        %v643 = vpop.permute.xlu0 %642
        %v645 = vadd.f32 %v638, %v643
        %v646 = vmax.f32 %v645, 0.0
        %v647 = vld [vmem:[%s5] sm:$0xf]
        %v648 = vld [vmem:[%s6] sm:$0xff]
        %650 = vset.pattern.permute.xlu0 0
        %651 = vperm.xlu0 %650, %v648
        %v652 = vpop.permute.xlu0 %651
        %v655 = vsel %vm320, %v647, 0
        %v658 = vsel %vm333, %v308, 0
        %660 = vmatprep.subr.bf16.mxu0 0
        %661 = vmatpush1.bf16.msra.mxu0 0
        %662 = vmatprep.subr.bf16.mxu0 0
        %663 = vmatpush1.bf16.msra.mxu0 0
        %664 = vmatprep.subr.bf16.mxu0 0
        %665 = vmatpush1.bf16.msra.mxu0 0
        %666 = vmatprep.subr.bf16.mxu0 0
        %667 = vmatpush1.bf16.msra.mxu0 0
        %668 = vmatprep.subr.bf16.mxu0 0
        %669 = vmatpush1.bf16.msra.mxu0 0
        %670 = vmatprep.subr.bf16.mxu0 0
        %671 = vmatpush1.bf16.msra.mxu0 0
        %672 = vmatprep.subr.bf16.mxu0 0
        %673 = vmatpush1.bf16.msra.mxu0 0
        %674 = vmatprep.subr.bf16.mxu0 0
        %675 = vmatpush1.bf16.msra.mxu0 %v658
        %676 = vmatprep.subr.bf16.mxu0 0
        %677 = vmatpush2.bf16.msra.mxu0 0
        %678 = vmatprep.subr.bf16.mxu0 0
        %679 = vmatpush2.bf16.msra.mxu0 0
        %680 = vmatprep.subr.bf16.mxu0 0
        %681 = vmatpush2.bf16.msra.mxu0 0
        %682 = vmatprep.subr.bf16.mxu0 0
        %683 = vmatpush2.bf16.msra.mxu0 0
        %684 = vmatprep.subr.bf16.mxu0 0
        %685 = vmatpush2.bf16.msra.mxu0 0
        %686 = vmatprep.subr.bf16.mxu0 0
        %687 = vmatpush2.bf16.msra.mxu0 0
        %688 = vmatprep.subr.bf16.mxu0 0
        %689 = vmatpush2.bf16.msra.mxu0 0
        %690 = vmatprep.subr.bf16.mxu0 0
        %691 = vmatpush2.bf16.msra.mxu0 0
        %692 = vmatprep.mubr.bf16.mxu0 0
        %693 = vmatmul.mubr.bf16.gmra.mxu0 %v655
        %v694 = vpop.f32.mrf.mxu0
        %v695 = vadd.f32 %v652, %v694
        %v696 = vpop.f32.mrf.mxu0
        %v697 = vpop.f32.mrf.mxu0
        %v698 = vpop.f32.mrf.mxu0
        %699 = vdwg.mxu0
        %v700 = vadd.f32 %v646, %v695
        %v701 = vmax.f32 %v700, 0.0
        %vm702 = vcmask 130048
        %703 = vst.msk [vmem:[%s291] sm:$0xff] %vm702, %v701
        %s704 = sand.u32 %s197, 1
        %s705 = scalar_lea.sflag [#allocation5], %s704
        %s706 = sand.u32 %s197, 1
        %s707 = smul.addr %s706, 8
        %s708 = scalar_lea.vmem [#allocation4], %s707
        // Predicated region
        $region53: #{tpu_custom_call.1} parent=47 // pred_check
          %p709 = pneg %p207
        $region54: #{tpu_custom_call.1} parent=47 // pred_check_branch
          %711 = sbr.rel (%p709) target = $region56
        $region55: #{tpu_custom_call.1} parent=47 // pred_region
          %s713 = ssub.s32 128, 128
          %714 = vsyncadd %s705, %s713
          %s715 = sadd.s32 %s26, %s25
          %s716 = smul.addr %s715, 128
          %s717 = scalar_lea.hbm %s7, %s716
          %s719 = sshll.u32 %s708, 4
          %s720 = int_to_ptr.vmem [resolvable:$true] %s719
          %722 = dma.vmem_to_hbm [thread:$0]  %s720, 128, %s717, %s705
        $region56: #{tpu_custom_call.1} parent=47 // pred_fallthru
          _
      $region48: #{tpu_custom_call.1} parent=5 // pred_fallthru
        _
      %p723 = scmp.le.s32.totalorder 2, %s16
      // Predicated region
      $region57: #{tpu_custom_call.1} parent=5 // pred_check
        %p724 = pneg %p723
      $region58: #{tpu_custom_call.1} parent=5 // pred_check_branch
        %726 = sbr.rel (%p724) target = $region60
      $region59: #{tpu_custom_call.1} parent=5 // pred_region
        %s727 = ssub.s32 %s16, 2
        // Predicated region
        $region61: #{tpu_custom_call.1} parent=59 // pred_check
          %p728 = pneg %p213
        $region62: #{tpu_custom_call.1} parent=59 // pred_check_branch
          %730 = sbr.rel (%p728) target = $region64
        $region63: #{tpu_custom_call.1} parent=59 // pred_region
          %s731 = sand.u32 %s198, 1
          %s732 = scalar_lea.sflag [#allocation5], %s731
          %s733 = sand.u32 %s198, 1
          %s734 = smul.addr %s733, 8
          %s735 = scalar_lea.vmem [#allocation4], %s734
          %736 = dma.done %s732, 128
        $region64: #{tpu_custom_call.1} parent=59 // pred_fallthru
          _
      $region60: #{tpu_custom_call.1} parent=5 // pred_fallthru
        _
    $region6: #{tpu_custom_call.1} parent=1 // loop_footer
      %s20 = sadd.s32 1, %s16
    $region7: #{tpu_custom_call.1} parent=1 // loop_footer_branch
      %15 = sbr.rel target = $region3
    $region8: #{tpu_custom_call.1} parent=1 // loop_exit
      _
    %737 = vsyncpa [#allocation5], 1
    %s738 = scalar_lea.sflag [#allocation5], 1
    %739 = vsyncpa %s738, 1

</llo_original>
